<compile_context>
chip_gen: v7x
topology: tpu7x:2x2x1
jax: 0.10.0
libtpu: 0.0.40
codegen_flags: <defaults>
</compile_context>

<pallas_src>
import functools

import jax
import jax.numpy as jnp
from jax.experimental import pallas as pl
from jax.experimental.pallas import tpu as pltpu


def _round_up(x: int, m: int) -> int:
    return (x + m - 1) // m * m


def _pick_tile(dim_pad: int, cap: int) -> int:
    """Largest 128-multiple divisor of dim_pad (itself a multiple of 128) <= cap."""
    if dim_pad <= cap:
        return dim_pad
    m = dim_pad // 128
    for d in range(cap // 128, 0, -1):
        if m % d == 0:
            return 128 * d
    return 128


def _vmem_budget_bytes() -> int:
    """Per-generation VMEM budget for tiles (leave headroom for compiler scratch)."""
    try:
        cap = int(pltpu.get_tpu_info().vmem_capacity_bytes)
    except Exception:
        cap = 64 * 1024 * 1024  # conservative: assume v7x-style 64 MiB per core
    if cap <= 64 * 1024 * 1024:
        return 40 * 1024 * 1024      # v7x
    return 96 * 1024 * 1024          # v5e / v6e (128 MiB physical)


def _maybe_tanh(x, apply_tanh: bool):
    if not apply_tanh:
        return x
    if x.dtype == jnp.float32:
        return jnp.tanh(x)
    # v5e's VPU/EUP have no native bf16 path; compute tanh in f32 and cast back
    # so the MXU still sees the native (narrow) operand dtype.
    return jnp.tanh(x.astype(jnp.float32)).astype(x.dtype)


def _fc_kernel_singlek(x_ref, w_ref, b_ref, o_ref, *, apply_tanh: bool):
    # Single K tile: no accumulator scratch, write the output tile directly.
    x = _maybe_tanh(x_ref[...], apply_tanh)
    acc = jnp.dot(x, w_ref[...], preferred_element_type=jnp.float32)
    o_ref[...] = (acc + b_ref[...].astype(jnp.float32)).astype(o_ref.dtype)


def _fc_kernel_multik(x_ref, w_ref, b_ref, o_ref, acc_ref, *, apply_tanh: bool):
    # x_ref: (tm, tk)  w_ref: (tk, tn)  b_ref: (1, tn)  o_ref: (tm, tn)
    # acc_ref: (tm, tn) f32 scratch, persistent across the K grid axis.
    k = pl.program_id(2)
    x = _maybe_tanh(x_ref[...], apply_tanh)
    prod = jnp.dot(x, w_ref[...], preferred_element_type=jnp.float32)

    @pl.when(k == 0)
    def _():
        acc_ref[...] = prod          # write, not zero-init + accumulate

    @pl.when(k > 0)
    def _():
        acc_ref[...] += prod

    @pl.when(k == pl.num_programs(2) - 1)
    def _():
        o_ref[...] = (acc_ref[...] + b_ref[...].astype(jnp.float32)).astype(o_ref.dtype)


def prepare_fc_params(weight, bias, *, tk_cap=2048, tn_cap=1024,
                      allow_weight_resident=True):
    """One-time parameter prep: transpose + zero-pad to tile-friendly shapes.

    weight: (output_dim, input_dim)   -- PyTorch nn.Linear layout
    bias:   (output_dim,)
    Returns (w_pad, b_pad, meta) with w_pad: (K_pad, N_pad), b_pad: (1, N_pad).
    """
    output_dim, input_dim = weight.shape
    assert bias.shape == (output_dim,)
    w_bytes = jnp.dtype(weight.dtype).itemsize

    # K (reduction) tiling: no padding at all if the whole K fits one tile.
    if input_dim <= tk_cap:
        K_pad, tk = input_dim, input_dim
    else:
        K_pad = _round_up(input_dim, 128)
        tk = _pick_tile(K_pad, tk_cap)

    # N (lane) tiling: always pad to a lane-dense multiple of 128.
    N_pad = _round_up(output_dim, 128)
    tn = N_pad if N_pad <= tn_cap else _pick_tile(N_pad, tn_cap)

    # Weight-resident override: if the whole padded weight (double-buffered) plus
    # worst-case x/out tiles fit the VMEM budget, use a single KxN weight tile so
    # the weight is streamed from HBM exactly once per call (not once per M tile).
    if allow_weight_resident:
        est_m = 256
        resident_need = (2 * K_pad * N_pad * w_bytes      # weight (double-buffered)
                         + 2 * est_m * K_pad * w_bytes    # x tile
                         + 2 * est_m * N_pad * 4          # out tile (<= f32)
                         + 2 * N_pad * 4)                 # bias
        if resident_need <= _vmem_budget_bytes():
            tk, tn = K_pad, N_pad

    w_pad = jnp.zeros((K_pad, N_pad), weight.dtype).at[:input_dim, :output_dim].set(
        weight.T)
    b_pad = jnp.zeros((1, N_pad), bias.dtype).at[0, :output_dim].set(bias)
    meta = (tk, tn, input_dim, output_dim)
    return w_pad, b_pad, meta


def fc_forward(x, w_pad, b_pad, meta, *, use_activation=True, tile_m=None):
    """Apply the FC layer to x: (..., input_dim) -> (..., output_dim)."""
    tk, tn, input_dim, output_dim = meta
    K_pad, N_pad = w_pad.shape
    assert x.shape[-1] == input_dim
    lead_shape = x.shape[:-1]
    x2 = x.reshape(-1, input_dim)
    batch = x2.shape[0]

    n_tiles = N_pad // tn
    k_tiles = K_pad // tk
    multi_k = k_tiles > 1

    # tanh hoisting: with >1 N tile, do it once in the wrapper (fused XLA pass)
    # instead of recomputing it on the EUP once per N tile inside the kernel.
    tanh_in_wrapper = use_activation and (n_tiles > 1)
    tanh_in_kernel = use_activation and not tanh_in_wrapper
    if tanh_in_wrapper:
        x2 = jnp.tanh(x2)

    # Only K is zero-padded (tanh(0)=0 and padded weight rows are 0, so padded
    # columns are neutral). The ragged M tail is handled by boundary blocks.
    if K_pad != input_dim:
        x2 = jnp.pad(x2, ((0, 0), (0, K_pad - input_dim)))

    if tile_m is None:
        tile_m = min(256, _round_up(batch, 16))
    m_tiles = pl.cdiv(batch, tile_m)
    # v7x has 2 TensorCores: make sure the parallel (M, N) grid has >= 2 blocks.
    if m_tiles * n_tiles == 1 and tile_m >= 256:
        tile_m //= 2
        m_tiles = pl.cdiv(batch, tile_m)

    in_bytes = x2.dtype.itemsize
    out_dtype = x.dtype
    vmem_need = (2 * (tile_m * tk + tk * tn) * in_bytes
                 + 2 * tn * b_pad.dtype.itemsize
                 + 2 * tile_m * tn * jnp.dtype(out_dtype).itemsize
                 + (tile_m * tn * 4 if multi_k else 0))
    vmem_limit = int(min(_vmem_budget_bytes(),
                         max(int(1.25 * vmem_need), 8 * 1024 * 1024)))

    cost = pl.CostEstimate(
        flops=2 * batch * K_pad * N_pad,
        transcendentals=(batch * input_dim) if use_activation else 0,
        bytes_accessed=int(batch * K_pad * in_bytes
                           + w_pad.size * w_pad.dtype.itemsize
                           + b_pad.size * b_pad.dtype.itemsize
                           + batch * N_pad * jnp.dtype(out_dtype).itemsize),
    )

    if multi_k:
        grid = (m_tiles, n_tiles, k_tiles)
        in_specs = [
            pl.BlockSpec((tile_m, tk), lambda i, j, k: (i, k)),
            pl.BlockSpec((tk, tn), lambda i, j, k: (k, j)),
            pl.BlockSpec((1, tn), lambda i, j, k: (0, j)),
        ]
        out_specs = pl.BlockSpec((tile_m, tn), lambda i, j, k: (i, j))
        scratch_shapes = [pltpu.VMEM((tile_m, tn), jnp.float32)]
        kernel = functools.partial(_fc_kernel_multik, apply_tanh=tanh_in_kernel)
        dim_sem = ("parallel", "parallel", "arbitrary")
    else:
        grid = (m_tiles, n_tiles)
        in_specs = [
            pl.BlockSpec((tile_m, tk), lambda i, j: (i, 0)),
            pl.BlockSpec((tk, tn), lambda i, j: (0, j)),
            pl.BlockSpec((1, tn), lambda i, j: (0, j)),
        ]
        out_specs = pl.BlockSpec((tile_m, tn), lambda i, j: (i, j))
        scratch_shapes = []
        kernel = functools.partial(_fc_kernel_singlek, apply_tanh=tanh_in_kernel)
        dim_sem = ("parallel", "parallel")

    out = pl.pallas_call(
        kernel,
        out_shape=jax.ShapeDtypeStruct((batch, N_pad), out_dtype),
        grid_spec=pltpu.PrefetchScalarGridSpec(
            num_scalar_prefetch=0,
            grid=grid,
            in_specs=in_specs,
            out_specs=out_specs,
            scratch_shapes=scratch_shapes,
        ),
        compiler_params=pltpu.CompilerParams(
            dimension_semantics=dim_sem,
            vmem_limit_bytes=vmem_limit),
        cost_estimate=cost,
    )(x2, w_pad, b_pad)

    if N_pad != output_dim:
        out = out[:, :output_dim]
    return out.reshape(lead_shape + (output_dim,))


def fc_layer(x, weight, bias, *, use_activation=True):
    """Convenience: prep params (one-time / constant-folds under jit) + apply."""
    w_pad, b_pad, meta = prepare_fc_params(weight, bias)
    return fc_forward(x, w_pad, b_pad, meta, use_activation=use_activation)


if __name__ == "__main__":
    # Small shapes implied by the module: x is (batch, input_dim).
    batch, input_dim, output_dim = 16, 32, 8

    key = jax.random.PRNGKey(0)
    kx, kw, kb = jax.random.split(key, 3)

    x = jax.random.normal(kx, (batch, input_dim), dtype=jnp.float32)
    # Deterministic init mimicking nn.Linear default (uniform +-1/sqrt(in)).
    bound = 1.0 / (input_dim ** 0.5)
    weight = jax.random.uniform(kw, (output_dim, input_dim),
                                minval=-bound, maxval=bound, dtype=jnp.float32)
    bias = jax.random.uniform(kb, (output_dim,),
                              minval=-bound, maxval=bound, dtype=jnp.float32)

    def ref_fc(xa, wa, ba, act):
        xa = jnp.tanh(xa) if act else xa
        return jnp.dot(xa, wa.T, precision=jax.lax.Precision.HIGHEST) + ba

    # Params prepared once; reused across calls.
    w_pad, b_pad, meta = prepare_fc_params(weight, bias)

    # 1) With tanh activation.
    out = jax.block_until_ready(fc_forward(x, w_pad, b_pad, meta, use_activation=True))
    assert out.shape == (batch, output_dim)
    assert jnp.allclose(out, ref_fc(x, weight, bias, True), atol=1e-5, rtol=1e-5)

    # 2) Without activation.
    out2 = jax.block_until_ready(
        fc_forward(x, w_pad, b_pad, meta, use_activation=False))
    assert jnp.allclose(out2, ref_fc(x, weight, bias, False), atol=1e-5, rtol=1e-5)

    # 3) Ragged batch (exercises the boundary-M path with no wrapper pad copy).
    x3 = jax.random.normal(jax.random.PRNGKey(1), (13, input_dim), dtype=jnp.float32)
    out3 = jax.block_until_ready(
        fc_forward(x3, w_pad, b_pad, meta, use_activation=True))
    assert out3.shape == (13, output_dim)
    assert jnp.allclose(out3, ref_fc(x3, weight, bias, True), atol=1e-5, rtol=1e-5)

    # 4) Forced multi-tile config (small caps): exercises the 3-D K-accumulation
    #    grid, the hoisted-tanh wrapper path, and ragged-M boundary blocks.
    in4, out4_dim, b4 = 256, 256, 40
    k4x, k4w, k4b = jax.random.split(jax.random.PRNGKey(2), 3)
    x4 = jax.random.normal(k4x, (b4, in4), dtype=jnp.float32)
    bound4 = 1.0 / (in4 ** 0.5)
    w4 = jax.random.uniform(k4w, (out4_dim, in4),
                            minval=-bound4, maxval=bound4, dtype=jnp.float32)
    bias4 = jax.random.uniform(k4b, (out4_dim,),
                               minval=-bound4, maxval=bound4, dtype=jnp.float32)
    w4p, b4p, meta4 = prepare_fc_params(w4, bias4, tk_cap=128, tn_cap=128,
                                        allow_weight_resident=False)
    out4 = jax.block_until_ready(
        fc_forward(x4, w4p, b4p, meta4, use_activation=True))
    assert out4.shape == (b4, out4_dim)
    assert jnp.allclose(out4, ref_fc(x4, w4, bias4, True), atol=1e-4, rtol=1e-4)

    print("KERNEL_OK")
</pallas_src>

<mosaic_0001>
module attributes {stable_mosaic.version = 11 : i64} {
  func.func @_fc_kernel_singlek(%arg0: i32, %arg1: i32, %arg2: memref<16x32xf32, #tpu.memory_space<vmem>>, %arg3: memref<32x128xf32, #tpu.memory_space<vmem>>, %arg4: memref<1x128xf32, #tpu.memory_space<vmem>>, %arg5: memref<16x128xf32, #tpu.memory_space<vmem>>) attributes {dimension_semantics = [#tpu.dimension_semantics<parallel>, #tpu.dimension_semantics<parallel>], iteration_bounds = array<i64: 1, 1>, scalar_prefetch = 0 : i64, scratch_operands = 0 : i64, tpu.core_type = #tpu.core_type<tc>, window_params = [{transform_indices = @transform_0, window_bounds = array<i64: 16, 32>}, {transform_indices = @transform_1, window_bounds = array<i64: 32, 128>}, {transform_indices = @transform_2, window_bounds = array<i64: 1, 128>}, {transform_indices = @transform_3, window_bounds = array<i64: 16, 128>}]} {
    %c0 = arith.constant 0 : index
    %c0_0 = arith.constant 0 : index
    %0 = vector.load %arg2[%c0, %c0_0] : memref<16x32xf32, #tpu.memory_space<vmem>>, vector<16x32xf32>
    %1 = math.tanh %0 : vector<16x32xf32>
    %c0_1 = arith.constant 0 : index
    %c0_2 = arith.constant 0 : index
    %2 = vector.load %arg3[%c0_1, %c0_2] : memref<32x128xf32, #tpu.memory_space<vmem>>, vector<32x128xf32>
    %cst = arith.constant dense<0.000000e+00> : vector<16x128xf32>
    %3 = tpu.matmul %1, %2, %cst {dimension_numbers = #tpu.dot_dimension_numbers<[1], [0], [0], [1], [0, 0, 1, 1], [], []>} : vector<16x32xf32>, vector<32x128xf32>, vector<16x128xf32> -> vector<16x128xf32>
    %c0_3 = arith.constant 0 : index
    %c0_4 = arith.constant 0 : index
    %4 = vector.load %arg4[%c0_3, %c0_4] : memref<1x128xf32, #tpu.memory_space<vmem>>, vector<1x128xf32>
    %5 = vector.broadcast %4 : vector<1x128xf32> to vector<16x128xf32>
    %6 = arith.addf %3, %5 : vector<16x128xf32>
    %c0_5 = arith.constant 0 : index
    %c0_6 = arith.constant 0 : index
    %7 = vector.load %arg5[%c0_5, %c0_6] : memref<16x128xf32, #tpu.memory_space<vmem>>, vector<16x128xf32>
    tpu.vector_store %arg5[%c0_5, %c0_6], %6 {strides = array<i32>} : memref<16x128xf32, #tpu.memory_space<vmem>>, vector<16x128xf32>,
    return
  }
  func.func @transform_0(%arg0: i32, %arg1: i32) -> (i32, i32) {
    %c0_i32 = arith.constant 0 : i32
    %c0_i32_0 = arith.constant 0 : i32
    return %arg0, %c0_i32 : i32, i32
  }
  func.func @transform_1(%arg0: i32, %arg1: i32) -> (i32, i32) {
    %c0_i32 = arith.constant 0 : i32
    %c0_i32_0 = arith.constant 0 : i32
    return %c0_i32, %arg1 : i32, i32
  }
  func.func @transform_2(%arg0: i32, %arg1: i32) -> (i32, i32) {
    %c0_i32 = arith.constant 0 : i32
    %c0_i32_0 = arith.constant 0 : i32
    return %c0_i32, %arg1 : i32, i32
  }
  func.func @transform_3(%arg0: i32, %arg1: i32) -> (i32, i32) {
    %c0_i32 = arith.constant 0 : i32
    return %arg0, %arg1 : i32, i32
  }
}

</mosaic_0001>

<llo_original>
// kernel: tpu_custom_call.1
$region0: #{tpu_custom_call.1}
  #allocation0 [shape = 'u32[]', space=smem, size = 0x4, offset = 0x4, fixed_abs, tag = 'smem constant byte address 0x4 - core index']
  #allocation1 [shape = 'u32[144,128]{1,0:T(1,128)}', space=vmem, size = 0x12000, scoped, tag = 'internal scratch']
  %s0 = inlined_call_operand.hbm [shape: f32[16,32], index: 0, kind: input, shape index: {}]
  %s1 = inlined_call_operand.hbm [shape: f32[32,128], index: 1, kind: input, shape index: {}]
  %s2 = inlined_call_operand.vmem [shape: f32[1,128], index: 2, kind: input, shape index: {}]
  %s3 = inlined_call_operand.hbm [shape: f32[16,128], index: 3, kind: output, shape index: {}]
  %s4 = sld [smem:[#allocation0]]
  $region30: #{tpu_custom_call.1} parent=0
    _
  %s6 = ssub.s32 1, %s4
  %s7 = scalar_select 0, %s6, %s4
  $region1: #{tpu_custom_call.1} parent=0
    #allocation2 [shape = 'u8[8192]{0}', space=vmem, size = 0x2000, scoped, tag = 'input window, operand 0, single buffered']
    #allocation3 [shape = 's32[1]{0}', space=sflag, size = 0x4, scoped, tag = 'scoped memory for tpu_custom_call.1']
    #allocation4 [shape = 's32[1]{0}', space=sflag, size = 0x4, scoped, tag = 'scoped memory for tpu_custom_call.1']
    #allocation5 [shape = 'u8[16384]{0}', space=vmem, size = 0x4000, scoped, tag = 'input window, operand 1, single buffered']
    #allocation6 [shape = 's32[1]{0}', space=sflag, size = 0x4, scoped, tag = 'scoped memory for tpu_custom_call.1']
    #allocation7 [shape = 'u8[8192]{0}', space=vmem, size = 0x2000, scoped, tag = 'output window, operand 0, single buffered']
    %8 = vsyncpa [#allocation3], 0
    %9 = vsyncpa [#allocation6], 0
    %10 = vsyncpa [#allocation4], 0
    // Predicated region
    $region2: #{tpu_custom_call.1} parent=1 // pred_check
      _
    $region3: #{tpu_custom_call.1} parent=1 // pred_check_branch
      %12 = sbr.rel (0) target = $region5
    $region4: #{tpu_custom_call.1} parent=1 // pred_region
      %s14 = ssub.s32 256, 256
      %15 = vsyncadd [#allocation3], %s14
      %s16 = sshll.u32 [#allocation2], 4
      %s17 = int_to_ptr.vmem [resolvable:$true] %s16
      %22 = dma.hbm_to_vmem [thread:$0]  %s0, 256, %s17, [#allocation3], 128, 128, 8
    $region5: #{tpu_custom_call.1} parent=1 // pred_fallthru
      _
    // Predicated region
    $region6: #{tpu_custom_call.1} parent=1 // pred_check
      _
    $region7: #{tpu_custom_call.1} parent=1 // pred_check_branch
      %24 = sbr.rel (0) target = $region9
    $region8: #{tpu_custom_call.1} parent=1 // pred_region
      %s26 = ssub.s32 512, 512
      %27 = vsyncadd [#allocation6], %s26
      %s28 = sshll.u32 [#allocation5], 4
      %s29 = int_to_ptr.vmem [resolvable:$true] %s28
      %34 = dma.hbm_to_vmem [thread:$0]  %s1, 512, %s29, [#allocation6], 128, 128, 8
    $region9: #{tpu_custom_call.1} parent=1 // pred_fallthru
      _
    // Predicated region
    $region10: #{tpu_custom_call.1} parent=1 // pred_check
      _
    $region11: #{tpu_custom_call.1} parent=1 // pred_check_branch
      %36 = sbr.rel (0) target = $region13
    $region12: #{tpu_custom_call.1} parent=1 // pred_region
      _
    $region13: #{tpu_custom_call.1} parent=1 // pred_fallthru
      _
    // Predicated region
    $region14: #{tpu_custom_call.1} parent=1 // pred_check
      _
    $region15: #{tpu_custom_call.1} parent=1 // pred_check_branch
      %38 = sbr.rel (0) target = $region17
    $region16: #{tpu_custom_call.1} parent=1 // pred_region
      %39 = dma.done [#allocation3], 256
    $region17: #{tpu_custom_call.1} parent=1 // pred_fallthru
      _
    // Predicated region
    $region18: #{tpu_custom_call.1} parent=1 // pred_check
      _
    $region19: #{tpu_custom_call.1} parent=1 // pred_check_branch
      %41 = sbr.rel (0) target = $region21
    $region20: #{tpu_custom_call.1} parent=1 // pred_region
      %42 = dma.done [#allocation6], 512
    $region21: #{tpu_custom_call.1} parent=1 // pred_fallthru
      _
    %v43 = vld [vmem:[#allocation2] sm:$0xff]
    %v44 = vld [vmem:[#allocation2 + $0x8] sm:$0xff]
    %v45 = vtanh.pop %v43
    %v46 = vtanh.pop %v44
    %v47 = vld [vmem:[#allocation5] sm:$0xff]
    %v48 = vld [vmem:[#allocation5 + $0x8] sm:$0xff]
    %v49 = vld [vmem:[#allocation5 + $0x10] sm:$0xff]
    %v50 = vld [vmem:[#allocation5 + $0x18] sm:$0xff]
    %v51 = vld [vmem:[%s2] sm:$0x1]
    %v53 = vlaneseq
    %v54 = vshrl.u32 %v53, 7
    %v55 = vsub.s32 0, %v54
    %v56 = vrot.slane %v51, %v55
    %vm58 = vcmask 261120
    %v60 = vsel %vm58, %v45, 0
    %v63 = vsel %vm58, %v46, 0
    %65 = vmatprep.subr.mxu0 0.0
    %66 = vmatpush1.msra.mxu0 %v47
    %67 = vmatprep.subr.mxu0 0.0
    %68 = vmatpush1.msra.mxu0 %v48
    %69 = vmatprep.subr.mxu0 0.0
    %70 = vmatpush1.msra.mxu0 %v49
    %71 = vmatprep.subr.mxu0 0.0
    %72 = vmatpush1.msra.mxu0 %v50
    %73 = vmatprep.subr.mxu0 0.0
    %74 = vmatpush1.msra.mxu0 0.0
    %75 = vmatprep.subr.mxu0 0.0
    %76 = vmatpush1.msra.mxu0 0.0
    %77 = vmatprep.subr.mxu0 0.0
    %78 = vmatpush1.msra.mxu0 0.0
    %79 = vmatprep.subr.mxu0 0.0
    %80 = vmatpush1.msra.mxu0 0.0
    %81 = vmatprep.subr.mxu0 0.0
    %82 = vmatpush1.msra.mxu0 0.0
    %83 = vmatprep.subr.mxu0 0.0
    %84 = vmatpush1.msra.mxu0 0.0
    %85 = vmatprep.subr.mxu0 0.0
    %86 = vmatpush1.msra.mxu0 0.0
    %87 = vmatprep.subr.mxu0 0.0
    %88 = vmatpush1.msra.mxu0 0.0
    %89 = vmatprep.subr.mxu0 0.0
    %90 = vmatpush1.msra.mxu0 0.0
    %91 = vmatprep.subr.mxu0 0.0
    %92 = vmatpush1.msra.mxu0 0.0
    %93 = vmatprep.subr.mxu0 0.0
    %94 = vmatpush1.msra.mxu0 0.0
    %95 = vmatprep.subr.mxu0 0.0
    %96 = vmatpush1.msra.mxu0 0.0
    %97 = vmatprep.subr.mxu0 0.0
    %98 = vmatpush1.msra.mxu0 0.0
    %99 = vmatprep.subr.mxu0 0.0
    %100 = vmatpush1.msra.mxu0 0.0
    %101 = vmatprep.subr.mxu0 0.0
    %102 = vmatpush1.msra.mxu0 0.0
    %103 = vmatprep.subr.mxu0 0.0
    %104 = vmatpush1.msra.mxu0 0.0
    %105 = vmatprep.subr.mxu0 0.0
    %106 = vmatpush1.msra.mxu0 0.0
    %107 = vmatprep.subr.mxu0 0.0
    %108 = vmatpush1.msra.mxu0 0.0
    %109 = vmatprep.subr.mxu0 0.0
    %110 = vmatpush1.msra.mxu0 0.0
    %111 = vmatprep.subr.mxu0 0.0
    %112 = vmatpush1.msra.mxu0 0.0
    %113 = vmatprep.subr.mxu0 0.0
    %114 = vmatpush1.msra.mxu0 0.0
    %115 = vmatprep.subr.mxu0 0.0
    %116 = vmatpush1.msra.mxu0 0.0
    %117 = vmatprep.subr.mxu0 0.0
    %118 = vmatpush1.msra.mxu0 0.0
    %119 = vmatprep.subr.mxu0 0.0
    %120 = vmatpush1.msra.mxu0 0.0
    %121 = vmatprep.subr.mxu0 0.0
    %122 = vmatpush1.msra.mxu0 0.0
    %123 = vmatprep.subr.mxu0 0.0
    %124 = vmatpush1.msra.mxu0 0.0
    %125 = vmatprep.subr.mxu0 0.0
    %126 = vmatpush1.msra.mxu0 0.0
    %127 = vmatprep.subr.mxu0 0.0
    %128 = vmatpush1.msra.mxu0 0.0
    %129 = vmatprep.mubr.f32.mxu0 0.0
    %130 = vmatmul.mubr.f32.gmra.mrb[0].mxu0 %v60
    %v131 = vpop.f32.mrb[0].mxu0
    %v132 = vadd.f32 %v56, %v131
    %v133 = vpop.f32.mrb[0].mxu0
    %134 = vmatprep.mubr.f32.mxu0 0.0
    %135 = vmatmul.mubr.f32.gmra.mrb[0].mxu0 %v63
    %v136 = vpop.f32.mrb[0].mxu0
    %v137 = vadd.f32 %v56, %v136
    %v138 = vpop.f32.mrb[0].mxu0
    %139 = vdwg.mxu0
    %140 = vst [vmem:[#allocation7] sm:$0xff] %v132
    %141 = vst [vmem:[#allocation7 + $0x8] sm:$0xff] %v137
    // Predicated region
    $region22: #{tpu_custom_call.1} parent=1 // pred_check
      _
    $region23: #{tpu_custom_call.1} parent=1 // pred_check_branch
      %143 = sbr.rel (0) target = $region25
    $region24: #{tpu_custom_call.1} parent=1 // pred_region
      %s145 = ssub.s32 256, 256
      %146 = vsyncadd [#allocation4], %s145
      %s147 = sshll.u32 [#allocation7], 4
      %s148 = int_to_ptr.vmem [resolvable:$true] %s147
      %153 = dma.vmem_to_hbm [thread:$0]  %s148, 256, %s3, [#allocation4], 128, 128, 8
    $region25: #{tpu_custom_call.1} parent=1 // pred_fallthru
      _
    // Predicated region
    $region26: #{tpu_custom_call.1} parent=1 // pred_check
      _
    $region27: #{tpu_custom_call.1} parent=1 // pred_check_branch
      %155 = sbr.rel (0) target = $region29
    $region28: #{tpu_custom_call.1} parent=1 // pred_region
      %156 = dma.done [#allocation4], 256
    $region29: #{tpu_custom_call.1} parent=1 // pred_fallthru
      _
    %157 = vsyncpa [#allocation3], 1
    %158 = vsyncpa [#allocation6], 1
    %159 = vsyncpa [#allocation4], 1

</llo_original>
